<compile_context>
chip_gen: v6e
topology: v6e:2x2x1
jax: 0.10.0
libtpu: 0.0.40
codegen_flags: <defaults>
</compile_context>

<pallas_src>
import jax
import jax.numpy as jnp
from jax import lax
from jax.experimental import pallas as pl
from jax.experimental.pallas import tpu as pltpu


_LANES = 128     # rows per group -> lane axis of the output
_TR_MAX = 64     # row-groups per grid step (64*128 = 8192 rows)
_CHUNK = 8       # row-groups per in-kernel compute chunk (8*128 = 1024 rows)


def _tide_temporal_decoder_kernel(
    x_ref, w1_ref, b1_ref, w2_ref, ws_ref, scalars_ref, o_ref,
):
    TR, L, F = x_ref.shape
    H = w1_ref.shape[1]

    # Small weights: constant index_maps keep them VMEM-resident across steps.
    w1 = w1_ref[...]        # (F, H)   fc1.weight^T
    b1 = b1_ref[...]        # (1, H)   fc1.bias
    w2 = w2_ref[...]        # (1, H)   fc2.weight
    ws = ws_ref[...]        # (1, F)   shortcut.weight
    bias = scalars_ref[0]   # fc2.bias + shortcut.bias   (SMEM scalar)
    gamma = scalars_ref[1]  # LayerNorm weight
    beta = scalars_ref[2]   # LayerNorm bias

    def process(g0, cg):
        # One sub-slab of `cg` row-groups: keeps the f32 intermediate h small
        # so it stays local instead of spilling a whole-tile (TR*128, H)
        # tensor to VMEM.
        x = x_ref[pl.ds(g0, cg), :, :]                        # (cg, 128, F)

        # fc1 + ReLU on the MXU (leading-dim merge reshape is a layout no-op).
        h = jnp.dot(x.reshape(cg * L, F), w1,
                    preferred_element_type=jnp.float32)
        h = jnp.maximum(h + b1, 0.0).reshape(cg, L, H)

        # fc2 (out_features = 1) and shortcut Linear(in, 1): VPU multiply +
        # lane reduction; results come out lane-dense (rows on the lane axis).
        y = jnp.sum(h * w2, axis=-1)                          # (cg, 128)
        sc = jnp.sum(x * ws, axis=-1)                         # (cg, 128)
        out = y + sc + bias

        # Dropout: identity in eval mode.

        # LayerNorm over the output-feature axis (size 1): per-row group is a
        # single scalar -> mean == out, var == 0, result == beta.  Kept in the
        # literal form to mirror nn.LayerNorm(1, eps=1e-5) with affine params.
        mean = out
        centered = out - mean                                 # == 0
        var = centered * centered                             # size-1 mean
        normed = centered * lax.rsqrt(var + 1e-5)
        o_ref[pl.ds(g0, cg), :] = (normed * gamma + beta).astype(o_ref.dtype)

    chunk = min(_CHUNK, TR)
    n_full = TR // chunk
    rem = TR - n_full * chunk

    def body(c, carry):
        process(pl.multiple_of(c * chunk, chunk), chunk)
        return carry

    lax.fori_loop(0, n_full, body, 0, unroll=True)
    if rem:  # static epilogue when the tile isn't a multiple of the chunk
        process(n_full * chunk, rem)


def tide_temporal_decoder(x, params):
    """x: (batch, seq, in_features) -> (batch, seq, 1).  Eval-mode forward."""
    B, S, F = x.shape
    rows = B * S

    w1, b1, w2, ws = params["w1"], params["b1"], params["w2"], params["ws"]
    H = w1.shape[1]

    # Pack the four (1,1) scalars into one SMEM operand:
    #   [fc2.bias + shortcut.bias, layernorm.gamma, layernorm.beta]
    scalars = jnp.concatenate([
        (params["b2"] + params["bs"]).reshape(1),
        params["gamma"].reshape(1),
        params["beta"].reshape(1),
    ]).astype(jnp.float32)

    # Regroup rows as (groups, 128) so the row-within-group index is the lane
    # index.  Padding (a copy) happens only when rows % 128 != 0, and only to
    # 128-row granularity; aligned inputs are passed with zero copies.
    n_groups = pl.cdiv(rows, _LANES)
    rows_g = n_groups * _LANES
    x2d = x.reshape(rows, F)
    if rows_g != rows:
        x2d = jnp.pad(x2d, ((0, rows_g - rows), (0, 0)))
    x3 = x2d.reshape(n_groups, _LANES, F)      # free reshape when unpadded

    # Row tile: big enough to amortize per-grid-step overhead, small enough to
    # double-buffer comfortably within the explicit 32 MiB VMEM budget on all
    # of v5e/v6e/v7x.  The grid edge need not divide n_groups (Pallas clips
    # the last block), so no tr-granularity padding is required.  For large
    # inputs (n_groups > 64) the grid has >= 2 steps, keeping both v7x
    # TensorCores busy via the "parallel" dimension semantics.
    tr = n_groups if n_groups <= _TR_MAX else _TR_MAX
    grid = (pl.cdiv(n_groups, tr),)

    row_tile = pl.BlockSpec((tr, _LANES, F), lambda i: (i, 0, 0))
    resident = lambda shape: pl.BlockSpec(shape, lambda i: (0, 0))

    out = pl.pallas_call(
        _tide_temporal_decoder_kernel,
        out_shape=jax.ShapeDtypeStruct((n_groups, _LANES), x.dtype),
        grid=grid,
        in_specs=[
            row_tile,                                          # x (groups,128,F)
            resident((F, H)),                                  # w1 = fc1.weight^T
            resident((1, H)),                                  # b1
            resident((1, H)),                                  # w2 = fc2.weight
            resident((1, F)),                                  # ws = shortcut.weight
            pl.BlockSpec(memory_space=pltpu.MemorySpace.SMEM), # packed scalars
        ],
        out_specs=pl.BlockSpec((tr, _LANES), lambda i: (i, 0)),
        compiler_params=pltpu.CompilerParams(
            dimension_semantics=("parallel",),
            vmem_limit_bytes=32 * 1024 * 1024,
        ),
    )(x3, w1, b1, w2, ws, scalars)

    # Row axis is contiguous in HBM; only the tiny (4 B/row) output is sliced.
    return out.reshape(rows_g)[:rows].reshape(B, S, 1)


def _reference(x, params):
    """Pure-JAX reference (mirrors the PyTorch forward in eval mode)."""
    B, S, F = x.shape
    x2d = x.reshape(B * S, F).astype(jnp.float32)
    h = jnp.maximum(x2d @ params["w1"] + params["b1"], 0.0)
    y = h @ params["w2"].T + params["b2"]        # (rows, 1)
    sc = x2d @ params["ws"].T + params["bs"]     # (rows, 1)
    out = y + sc
    mean = jnp.mean(out, axis=-1, keepdims=True)
    var = jnp.mean((out - mean) ** 2, axis=-1, keepdims=True)
    out = (out - mean) / jnp.sqrt(var + 1e-5) * params["gamma"] + params["beta"]
    return out.reshape(B, S, 1)


def init_params(key, in_features, hid_features):
    """Deterministic synthetic params (shapes follow nn.Linear / nn.LayerNorm)."""
    k1, k2, k3, k4, k5, k6 = jax.random.split(key, 6)
    s1 = 1.0 / jnp.sqrt(in_features)
    s2 = 1.0 / jnp.sqrt(hid_features)
    return {
        # fc1: Linear(in, hid) -- weight stored transposed as (in, hid)
        "w1": jax.random.uniform(k1, (in_features, hid_features), jnp.float32, -s1, s1),
        "b1": jax.random.uniform(k2, (1, hid_features), jnp.float32, -s1, s1),
        # fc2: Linear(hid, 1) -- weight in PyTorch layout (out=1, in=hid)
        "w2": jax.random.uniform(k3, (1, hid_features), jnp.float32, -s2, s2),
        "b2": jax.random.uniform(k4, (1, 1), jnp.float32, -s2, s2),
        # shortcut: Linear(in, 1) -- weight in PyTorch layout (1, in)
        "ws": jax.random.uniform(k5, (1, in_features), jnp.float32, -s1, s1),
        "bs": jax.random.uniform(k6, (1, 1), jnp.float32, -s1, s1),
        # LayerNorm(1) affine params (PyTorch defaults: gamma=1, beta=0)
        "gamma": jnp.ones((1, 1), jnp.float32),
        "beta": jnp.zeros((1, 1), jnp.float32),
    }


if __name__ == "__main__":
    batch, seq = 2, 8
    in_features, hid_features = 24, 32   # decoded y(t) concat projected X(t)

    key = jax.random.PRNGKey(0)
    kx, kp = jax.random.split(key)
    x = jax.random.normal(kx, (batch, seq, in_features), jnp.float32)
    params = init_params(kp, in_features, hid_features)

    out = tide_temporal_decoder(x, params)
    out = jax.block_until_ready(out)

    ref = _reference(x, params)
    assert out.shape == (batch, seq, 1), out.shape
    assert jnp.allclose(out, ref, atol=1e-5, rtol=1e-5), (
        float(jnp.max(jnp.abs(out - ref)))
    )
    print("KERNEL_OK")
</pallas_src>

<mosaic_0001>
module attributes {stable_mosaic.version = 11 : i64} {
  func.func @_tide_temporal_decoder_kernel(%arg0: i32, %arg1: memref<1x128x24xf32, #tpu.memory_space<vmem>>, %arg2: memref<24x32xf32, #tpu.memory_space<vmem>>, %arg3: memref<1x32xf32, #tpu.memory_space<vmem>>, %arg4: memref<1x32xf32, #tpu.memory_space<vmem>>, %arg5: memref<1x24xf32, #tpu.memory_space<vmem>>, %arg6: memref<3xf32, #tpu.memory_space<smem>>, %arg7: memref<1x128xf32, #tpu.memory_space<vmem>>) attributes {dimension_semantics = [#tpu.dimension_semantics<parallel>], iteration_bounds = array<i64: 1>, scalar_prefetch = 0 : i64, scratch_operands = 0 : i64, tpu.core_type = #tpu.core_type<tc>, window_params = [{transform_indices = @transform_0, window_bounds = array<i64: 1, 128, 24>}, {pipeline_mode = #tpu.pipeline_mode<synchronous>, transform_indices = @transform_1, window_bounds = array<i64: 24, 32>}, {pipeline_mode = #tpu.pipeline_mode<synchronous>, transform_indices = @transform_2, window_bounds = array<i64: 1, 32>}, {pipeline_mode = #tpu.pipeline_mode<synchronous>, transform_indices = @transform_3, window_bounds = array<i64: 1, 32>}, {pipeline_mode = #tpu.pipeline_mode<synchronous>, transform_indices = @transform_4, window_bounds = array<i64: 1, 24>}, {transform_indices = @transform_5, window_bounds = array<i64: 3>}, {transform_indices = @transform_6, window_bounds = array<i64: 1, 128>}]} {
    %c0 = arith.constant 0 : index
    %c0_0 = arith.constant 0 : index
    %0 = vector.load %arg2[%c0, %c0_0] : memref<24x32xf32, #tpu.memory_space<vmem>>, vector<24x32xf32>
    %c0_1 = arith.constant 0 : index
    %c0_2 = arith.constant 0 : index
    %1 = vector.load %arg3[%c0_1, %c0_2] : memref<1x32xf32, #tpu.memory_space<vmem>>, vector<1x32xf32>
    %c0_3 = arith.constant 0 : index
    %c0_4 = arith.constant 0 : index
    %2 = vector.load %arg4[%c0_3, %c0_4] : memref<1x32xf32, #tpu.memory_space<vmem>>, vector<1x32xf32>
    %c0_5 = arith.constant 0 : index
    %c0_6 = arith.constant 0 : index
    %3 = vector.load %arg5[%c0_5, %c0_6] : memref<1x24xf32, #tpu.memory_space<vmem>>, vector<1x24xf32>
    %c0_7 = arith.constant 0 : index
    %4 = memref.load %arg6[%c0_7] : memref<3xf32, #tpu.memory_space<smem>>
    %c1 = arith.constant 1 : index
    %5 = memref.load %arg6[%c1] : memref<3xf32, #tpu.memory_space<smem>>
    %c2 = arith.constant 2 : index
    %6 = memref.load %arg6[%c2] : memref<3xf32, #tpu.memory_space<smem>>
    %c0_i32 = arith.constant 0 : i32
    %c1_i32 = arith.constant 1 : i32
    %7 = arith.muli %c0_i32, %c1_i32 : i32
    %8 = tpu.assume_multiple %7, 1 : i32
    %9 = arith.index_cast %8 : i32 to index
    %c0_8 = arith.constant 0 : index
    %c0_9 = arith.constant 0 : index
    %10 = vector.load %arg1[%9, %c0_8, %c0_9] : memref<1x128x24xf32, #tpu.memory_space<vmem>>, vector<1x128x24xf32>
    %11 = vector.shape_cast %10 : vector<1x128x24xf32> to vector<128x24xf32>
    %cst = arith.constant dense<0.000000e+00> : vector<128x32xf32>
    %12 = tpu.matmul %11, %0, %cst {dimension_numbers = #tpu.dot_dimension_numbers<[1], [0], [0], [1], [0, 0, 1, 1], [], []>} : vector<128x24xf32>, vector<24x32xf32>, vector<128x32xf32> -> vector<128x32xf32>
    %13 = vector.broadcast %1 : vector<1x32xf32> to vector<128x32xf32>
    %14 = arith.addf %12, %13 : vector<128x32xf32>
    %cst_10 = arith.constant 0.000000e+00 : f32
    %15 = vector.broadcast %cst_10 : f32 to vector<128x32xf32>
    %16 = arith.maximumf %14, %15 : vector<128x32xf32>
    %17 = vector.shape_cast %16 : vector<128x32xf32> to vector<1x128x32xf32>
    %18 = vector.shape_cast %2 : vector<1x32xf32> to vector<1x1x32xf32>
    %19 = vector.broadcast %18 : vector<1x1x32xf32> to vector<1x128x32xf32>
    %20 = arith.mulf %17, %19 : vector<1x128x32xf32>
    %cst_11 = arith.constant dense<0.000000e+00> : vector<1x128xf32>
    %21 = vector.multi_reduction <add>, %20, %cst_11 [2] : vector<1x128x32xf32> to vector<1x128xf32>
    %22 = vector.shape_cast %3 : vector<1x24xf32> to vector<1x1x24xf32>
    %23 = vector.broadcast %22 : vector<1x1x24xf32> to vector<1x128x24xf32>
    %24 = arith.mulf %10, %23 : vector<1x128x24xf32>
    %cst_12 = arith.constant dense<0.000000e+00> : vector<1x128xf32>
    %25 = vector.multi_reduction <add>, %24, %cst_12 [2] : vector<1x128x24xf32> to vector<1x128xf32>
    %26 = arith.addf %21, %25 : vector<1x128xf32>
    %27 = vector.broadcast %4 : f32 to vector<1x128xf32>
    %28 = arith.addf %26, %27 : vector<1x128xf32>
    %29 = arith.subf %28, %28 : vector<1x128xf32>
    %30 = arith.mulf %29, %29 : vector<1x128xf32>
    %cst_13 = arith.constant 9.99999974E-6 : f32
    %31 = vector.broadcast %cst_13 : f32 to vector<1x128xf32>
    %32 = arith.addf %30, %31 : vector<1x128xf32>
    %33 = math.rsqrt %32 : vector<1x128xf32>
    %34 = arith.mulf %29, %33 : vector<1x128xf32>
    %35 = vector.broadcast %5 : f32 to vector<1x128xf32>
    %36 = arith.mulf %34, %35 : vector<1x128xf32>
    %37 = vector.broadcast %6 : f32 to vector<1x128xf32>
    %38 = arith.addf %36, %37 : vector<1x128xf32>
    %39 = arith.index_cast %8 : i32 to index
    %c0_14 = arith.constant 0 : index
    %40 = vector.load %arg7[%39, %c0_14] : memref<1x128xf32, #tpu.memory_space<vmem>>, vector<1x128xf32>
    tpu.vector_store %arg7[%39, %c0_14], %38 {strides = array<i32>} : memref<1x128xf32, #tpu.memory_space<vmem>>, vector<1x128xf32>,
    %c1_i32_15 = arith.constant 1 : i32
    return
  }
  func.func @transform_0(%arg0: i32) -> (i32, i32, i32) {
    %c0_i32 = arith.constant 0 : i32
    %c0_i32_0 = arith.constant 0 : i32
    %c0_i32_1 = arith.constant 0 : i32
    return %arg0, %c0_i32, %c0_i32_0 : i32, i32, i32
  }
  func.func @transform_1(%arg0: i32) -> (i32, i32) {
    %c0_i32 = arith.constant 0 : i32
    %c0_i32_0 = arith.constant 0 : i32
    %c0_i32_1 = arith.constant 0 : i32
    return %c0_i32, %c0_i32_0 : i32, i32
  }
  func.func @transform_2(%arg0: i32) -> (i32, i32) {
    %c0_i32 = arith.constant 0 : i32
    %c0_i32_0 = arith.constant 0 : i32
    %c0_i32_1 = arith.constant 0 : i32
    return %c0_i32, %c0_i32_0 : i32, i32
  }
  func.func @transform_3(%arg0: i32) -> (i32, i32) {
    %c0_i32 = arith.constant 0 : i32
    %c0_i32_0 = arith.constant 0 : i32
    %c0_i32_1 = arith.constant 0 : i32
    return %c0_i32, %c0_i32_0 : i32, i32
  }
  func.func @transform_4(%arg0: i32) -> (i32, i32) {
    %c0_i32 = arith.constant 0 : i32
    %c0_i32_0 = arith.constant 0 : i32
    %c0_i32_1 = arith.constant 0 : i32
    return %c0_i32, %c0_i32_0 : i32, i32
  }
  func.func @transform_5(%arg0: i32) -> i32 {
    %c0_i32 = arith.constant 0 : i32
    %c0_i32_0 = arith.constant 0 : i32
    return %c0_i32 : i32
  }
  func.func @transform_6(%arg0: i32) -> (i32, i32) {
    %c0_i32 = arith.constant 0 : i32
    %c0_i32_0 = arith.constant 0 : i32
    return %arg0, %c0_i32 : i32, i32
  }
}

</mosaic_0001>

<llo_original>
// kernel: tpu_custom_call.1
$region0: #{tpu_custom_call.1}
  #allocation0 [shape = 'u32[]', space=smem, size = 0x4, offset = 0x4, fixed_abs, tag = 'smem constant byte address 0x4 - core index']
  #allocation1 [shape = 'u32[144,128]{1,0:T(1,128)}', space=vmem, size = 0x12000, scoped, tag = 'internal scratch']
  %s0 = inlined_call_operand.vmem [shape: f32[1,128,24], index: 0, kind: input, shape index: {}]
  %s1 = inlined_call_operand.vmem [shape: f32[24,32], index: 1, kind: input, shape index: {}]
  %s2 = inlined_call_operand.vmem [shape: f32[1,32], index: 2, kind: input, shape index: {}]
  %s3 = inlined_call_operand.vmem [shape: f32[1,32], index: 3, kind: input, shape index: {}]
  %s4 = inlined_call_operand.vmem [shape: f32[1,24], index: 4, kind: input, shape index: {}]
  %s5 = inlined_call_operand.vmem [shape: f32[3], index: 5, kind: input, shape index: {}]
  %s6 = inlined_call_operand.hbm [shape: f32[1,128], index: 6, kind: output, shape index: {}]
  %s7 = sld [smem:[#allocation0]]
  $region38: #{tpu_custom_call.1} parent=0
    _
  %s9 = ssub.s32 1, %s7
  %s10 = scalar_select 0, %s9, %s7
  $region1: #{tpu_custom_call.1} parent=0
    #allocation2 [shape = 'u8[512]{0}', space=smem, size = 0x200, scoped, tag = 'input window, operand 5, single buffered']
    #allocation3 [shape = 's32[1]{0}', space=sflag, size = 0x4, scoped, tag = 'scoped memory for tpu_custom_call.1']
    #allocation4 [shape = 's32[1]{0}', space=sflag, size = 0x4, scoped, tag = 'scoped memory for tpu_custom_call.1']
    #allocation5 [shape = 'u8[512]{0}', space=vmem, size = 0x400, scoped, tag = 'output window, operand 0, single buffered']
    %11 = vsyncpa [#allocation4], 0
    %12 = vsyncpa [#allocation3], 0
    // Predicated region
    $region2: #{tpu_custom_call.1} parent=1 // pred_check
      _
    $region3: #{tpu_custom_call.1} parent=1 // pred_check_branch
      %14 = sbr.rel (0) target = $region5
    $region4: #{tpu_custom_call.1} parent=1 // pred_region
      _
    $region5: #{tpu_custom_call.1} parent=1 // pred_fallthru
      _
    // Predicated region
    $region6: #{tpu_custom_call.1} parent=1 // pred_check
      _
    $region7: #{tpu_custom_call.1} parent=1 // pred_check_branch
      %16 = sbr.rel (0) target = $region9
    $region8: #{tpu_custom_call.1} parent=1 // pred_region
      _
    $region9: #{tpu_custom_call.1} parent=1 // pred_fallthru
      _
    // Predicated region
    $region10: #{tpu_custom_call.1} parent=1 // pred_check
      _
    $region11: #{tpu_custom_call.1} parent=1 // pred_check_branch
      %18 = sbr.rel (0) target = $region13
    $region12: #{tpu_custom_call.1} parent=1 // pred_region
      _
    $region13: #{tpu_custom_call.1} parent=1 // pred_fallthru
      _
    // Predicated region
    $region14: #{tpu_custom_call.1} parent=1 // pred_check
      _
    $region15: #{tpu_custom_call.1} parent=1 // pred_check_branch
      %20 = sbr.rel (0) target = $region17
    $region16: #{tpu_custom_call.1} parent=1 // pred_region
      _
    $region17: #{tpu_custom_call.1} parent=1 // pred_fallthru
      _
    // Predicated region
    $region18: #{tpu_custom_call.1} parent=1 // pred_check
      _
    $region19: #{tpu_custom_call.1} parent=1 // pred_check_branch
      %22 = sbr.rel (0) target = $region21
    $region20: #{tpu_custom_call.1} parent=1 // pred_region
      _
    $region21: #{tpu_custom_call.1} parent=1 // pred_fallthru
      _
    // Predicated region
    $region22: #{tpu_custom_call.1} parent=1 // pred_check
      _
    $region23: #{tpu_custom_call.1} parent=1 // pred_check_branch
      %24 = sbr.rel (0) target = $region25
    $region24: #{tpu_custom_call.1} parent=1 // pred_region
      %s26 = ssub.s32 16, 16
      %27 = vsyncadd [#allocation4], %s26
      %s29 = sshll.u32 %s5, 4
      %s30 = int_to_ptr.vmem [resolvable:$true] %s29
      %32 = dma.vmem_to_smem %s30, 16, [#allocation2], [#allocation4]
    $region25: #{tpu_custom_call.1} parent=1 // pred_fallthru
      _
    // Predicated region
    $region26: #{tpu_custom_call.1} parent=1 // pred_check
      _
    $region27: #{tpu_custom_call.1} parent=1 // pred_check_branch
      %34 = sbr.rel (0) target = $region29
    $region28: #{tpu_custom_call.1} parent=1 // pred_region
      %35 = dma.done [#allocation4], 16
    $region29: #{tpu_custom_call.1} parent=1 // pred_fallthru
      _
    %36 = sfence
    %v37 = vld [vmem:[%s1] sm:$0xff]
    %v38 = vld [vmem:[%s1 + $0x8] sm:$0xff]
    %v39 = vld [vmem:[%s1 + $0x10] sm:$0xff]
    %v40 = vld [vmem:[%s2] sm:$0x1]
    %v41 = vld [vmem:[%s3] sm:$0x1]
    %v42 = vld [vmem:[%s4] sm:$0x1]
    %s43 = sld [smem:[#allocation2]]
    %s44 = sld [smem:[#allocation2 + $0x1]]
    %s45 = sld [smem:[#allocation2 + $0x2]]
    %s46 = smul.u32 0, 128
    %s47 = scalar_lea.vmem %s0, %s46
    %v48 = vld [vmem:[%s47] sm:$0xff]
    %v49 = vld [vmem:[%s47 + $0x8] sm:$0xff]
    %v50 = vld [vmem:[%s47 + $0x10] sm:$0xff]
    %v51 = vld [vmem:[%s47 + $0x18] sm:$0xff]
    %v52 = vld [vmem:[%s47 + $0x20] sm:$0xff]
    %v53 = vld [vmem:[%s47 + $0x28] sm:$0xff]
    %v54 = vld [vmem:[%s47 + $0x30] sm:$0xff]
    %v55 = vld [vmem:[%s47 + $0x38] sm:$0xff]
    %v56 = vld [vmem:[%s47 + $0x40] sm:$0xff]
    %v57 = vld [vmem:[%s47 + $0x48] sm:$0xff]
    %v58 = vld [vmem:[%s47 + $0x50] sm:$0xff]
    %v59 = vld [vmem:[%s47 + $0x58] sm:$0xff]
    %v60 = vld [vmem:[%s47 + $0x60] sm:$0xff]
    %v61 = vld [vmem:[%s47 + $0x68] sm:$0xff]
    %v62 = vld [vmem:[%s47 + $0x70] sm:$0xff]
    %v63 = vld [vmem:[%s47 + $0x78] sm:$0xff]
    %v65 = vlaneseq
    %v66 = vshrl.u32 %v65, 7
    %v67 = vsub.s32 0, %v66
    %v68 = vrot.slane %v40, %v67
    %vm70 = vcmask 195584
    %v72 = vsel %vm70, %v48, 0
    %v75 = vsel %vm70, %v49, 0
    %v78 = vsel %vm70, %v50, 0
    %v81 = vsel %vm70, %v51, 0
    %v84 = vsel %vm70, %v52, 0
    %v87 = vsel %vm70, %v53, 0
    %v90 = vsel %vm70, %v54, 0
    %v93 = vsel %vm70, %v55, 0
    %v96 = vsel %vm70, %v56, 0
    %v99 = vsel %vm70, %v57, 0
    %v102 = vsel %vm70, %v58, 0
    %v105 = vsel %vm70, %v59, 0
    %v108 = vsel %vm70, %v60, 0
    %v111 = vsel %vm70, %v61, 0
    %v114 = vsel %vm70, %v62, 0
    %v117 = vsel %vm70, %v63, 0
    %119 = vmatprep.subr.mxu0 0.0
    %120 = vmatpush1.msra.mxu0 0.0
    %121 = vmatprep.subr.mxu0 0.0
    %122 = vmatpush1.msra.mxu0 0.0
    %123 = vmatprep.subr.mxu0 0.0
    %124 = vmatpush1.msra.mxu0 0.0
    %125 = vmatprep.subr.mxu0 0.0
    %126 = vmatpush1.msra.mxu0 0.0
    %127 = vmatprep.subr.mxu0 0.0
    %128 = vmatpush1.msra.mxu0 0.0
    %129 = vmatprep.subr.mxu0 0.0
    %130 = vmatpush1.msra.mxu0 0.0
    %131 = vmatprep.subr.mxu0 0.0
    %132 = vmatpush1.msra.mxu0 0.0
    %133 = vmatprep.subr.mxu0 0.0
    %134 = vmatpush1.msra.mxu0 0.0
    %135 = vmatprep.subr.mxu0 0.0
    %136 = vmatpush1.msra.mxu0 0.0
    %137 = vmatprep.subr.mxu0 0.0
    %138 = vmatpush1.msra.mxu0 0.0
    %139 = vmatprep.subr.mxu0 0.0
    %140 = vmatpush1.msra.mxu0 0.0
    %141 = vmatprep.subr.mxu0 0.0
    %142 = vmatpush1.msra.mxu0 0.0
    %143 = vmatprep.subr.mxu0 0.0
    %144 = vmatpush1.msra.mxu0 0.0
    %145 = vmatprep.subr.mxu0 0.0
    %146 = vmatpush1.msra.mxu0 %v39
    %147 = vmatprep.subr.mxu0 0.0
    %148 = vmatpush1.msra.mxu0 %v38
    %149 = vmatprep.subr.mxu0 0.0
    %150 = vmatpush1.msra.mxu0 %v37
    %151 = vmatprep.subr.mxu0 0.0
    %152 = vmatpush2.msra.mxu0 0.0
    %153 = vmatprep.subr.mxu0 0.0
    %154 = vmatpush2.msra.mxu0 0.0
    %155 = vmatprep.subr.mxu0 0.0
    %156 = vmatpush2.msra.mxu0 0.0
    %157 = vmatprep.subr.mxu0 0.0
    %158 = vmatpush2.msra.mxu0 0.0
    %159 = vmatprep.subr.mxu0 0.0
    %160 = vmatpush2.msra.mxu0 0.0
    %161 = vmatprep.subr.mxu0 0.0
    %162 = vmatpush2.msra.mxu0 0.0
    %163 = vmatprep.subr.mxu0 0.0
    %164 = vmatpush2.msra.mxu0 0.0
    %165 = vmatprep.subr.mxu0 0.0
    %166 = vmatpush2.msra.mxu0 0.0
    %167 = vmatprep.subr.mxu0 0.0
    %168 = vmatpush2.msra.mxu0 0.0
    %169 = vmatprep.subr.mxu0 0.0
    %170 = vmatpush2.msra.mxu0 0.0
    %171 = vmatprep.subr.mxu0 0.0
    %172 = vmatpush2.msra.mxu0 0.0
    %173 = vmatprep.subr.mxu0 0.0
    %174 = vmatpush2.msra.mxu0 0.0
    %175 = vmatprep.subr.mxu0 0.0
    %176 = vmatpush2.msra.mxu0 0.0
    %177 = vmatprep.subr.mxu0 0.0
    %178 = vmatpush2.msra.mxu0 0.0
    %179 = vmatprep.subr.mxu0 0.0
    %180 = vmatpush2.msra.mxu0 0.0
    %181 = vmatprep.subr.mxu0 0.0
    %182 = vmatpush2.msra.mxu0 0.0
    %183 = vmatprep.mubr.f32.mxu0 0.0
    %184 = vmatmul.mubr.f32.gmra.mxu0 %v72
    %v185 = vpop.f32.mrf.mxu0
    %v186 = vadd.f32 %v68, %v185
    %v187 = vpop.f32.mrf.mxu0
    %188 = vmatprep.mubr.f32.mxu0 0.0
    %189 = vmatmul.mubr.f32.gmra.mxu0 %v75
    %v190 = vpop.f32.mrf.mxu0
    %v191 = vadd.f32 %v68, %v190
    %v192 = vpop.f32.mrf.mxu0
    %193 = vmatprep.mubr.f32.mxu0 0.0
    %194 = vmatmul.mubr.f32.gmra.mxu0 %v78
    %v195 = vpop.f32.mrf.mxu0
    %v196 = vadd.f32 %v68, %v195
    %v197 = vpop.f32.mrf.mxu0
    %198 = vmatprep.mubr.f32.mxu0 0.0
    %199 = vmatmul.mubr.f32.gmra.mxu0 %v81
    %v200 = vpop.f32.mrf.mxu0
    %v201 = vadd.f32 %v68, %v200
    %v202 = vpop.f32.mrf.mxu0
    %203 = vmatprep.mubr.f32.mxu0 0.0
    %204 = vmatmul.mubr.f32.gmra.mxu0 %v84
    %v205 = vpop.f32.mrf.mxu0
    %v206 = vadd.f32 %v68, %v205
    %v207 = vpop.f32.mrf.mxu0
    %208 = vmatprep.mubr.f32.mxu0 0.0
    %209 = vmatmul.mubr.f32.gmra.mxu0 %v87
    %v210 = vpop.f32.mrf.mxu0
    %v211 = vadd.f32 %v68, %v210
    %v212 = vpop.f32.mrf.mxu0
    %213 = vmatprep.mubr.f32.mxu0 0.0
    %214 = vmatmul.mubr.f32.gmra.mxu0 %v90
    %v215 = vpop.f32.mrf.mxu0
    %v216 = vadd.f32 %v68, %v215
    %v217 = vpop.f32.mrf.mxu0
    %218 = vmatprep.mubr.f32.mxu0 0.0
    %219 = vmatmul.mubr.f32.gmra.mxu0 %v93
    %v220 = vpop.f32.mrf.mxu0
    %v221 = vadd.f32 %v68, %v220
    %v222 = vpop.f32.mrf.mxu0
    %223 = vmatprep.mubr.f32.mxu0 0.0
    %224 = vmatmul.mubr.f32.gmra.mxu0 %v96
    %v225 = vpop.f32.mrf.mxu0
    %v226 = vadd.f32 %v68, %v225
    %v227 = vpop.f32.mrf.mxu0
    %228 = vmatprep.mubr.f32.mxu0 0.0
    %229 = vmatmul.mubr.f32.gmra.mxu0 %v99
    %v230 = vpop.f32.mrf.mxu0
    %v231 = vadd.f32 %v68, %v230
    %v232 = vpop.f32.mrf.mxu0
    %233 = vmatprep.mubr.f32.mxu0 0.0
    %234 = vmatmul.mubr.f32.gmra.mxu0 %v102
    %v235 = vpop.f32.mrf.mxu0
    %v236 = vadd.f32 %v68, %v235
    %v237 = vpop.f32.mrf.mxu0
    %238 = vmatprep.mubr.f32.mxu0 0.0
    %239 = vmatmul.mubr.f32.gmra.mxu0 %v105
    %v240 = vpop.f32.mrf.mxu0
    %v241 = vadd.f32 %v68, %v240
    %v242 = vpop.f32.mrf.mxu0
    %243 = vmatprep.mubr.f32.mxu0 0.0
    %244 = vmatmul.mubr.f32.gmra.mxu0 %v108
    %v245 = vpop.f32.mrf.mxu0
    %v246 = vadd.f32 %v68, %v245
    %v247 = vpop.f32.mrf.mxu0
    %248 = vmatprep.mubr.f32.mxu0 0.0
    %249 = vmatmul.mubr.f32.gmra.mxu0 %v111
    %v250 = vpop.f32.mrf.mxu0
    %v251 = vadd.f32 %v68, %v250
    %v252 = vpop.f32.mrf.mxu0
    %253 = vmatprep.mubr.f32.mxu0 0.0
    %254 = vmatmul.mubr.f32.gmra.mxu0 %v114
    %v255 = vpop.f32.mrf.mxu0
    %v256 = vadd.f32 %v68, %v255
    %v257 = vpop.f32.mrf.mxu0
    %258 = vmatprep.mubr.f32.mxu0 0.0
    %259 = vmatmul.mubr.f32.gmra.mxu0 %v117
    %v260 = vpop.f32.mrf.mxu0
    %v261 = vadd.f32 %v68, %v260
    %v262 = vpop.f32.mrf.mxu0
    %263 = vdwg.mxu0
    %v264 = vmax.f32 %v186, 0.0
    %v265 = vmax.f32 %v191, 0.0
    %v266 = vmax.f32 %v196, 0.0
    %v267 = vmax.f32 %v201, 0.0
    %v268 = vmax.f32 %v206, 0.0
    %v269 = vmax.f32 %v211, 0.0
    %v270 = vmax.f32 %v216, 0.0
    %v271 = vmax.f32 %v221, 0.0
    %v272 = vmax.f32 %v226, 0.0
    %v273 = vmax.f32 %v231, 0.0
    %v274 = vmax.f32 %v236, 0.0
    %v275 = vmax.f32 %v241, 0.0
    %v276 = vmax.f32 %v246, 0.0
    %v277 = vmax.f32 %v251, 0.0
    %v278 = vmax.f32 %v256, 0.0
    %v279 = vmax.f32 %v261, 0.0
    %v281 = vlaneseq
    %v282 = vshrl.u32 %v281, 7
    %v283 = vsub.s32 0, %v282
    %v284 = vrot.slane %v41, %v283
    %v286 = vmul.f32 %v264, %v284
    %v287 = vmul.f32 %v265, %v284
    %v288 = vmul.f32 %v266, %v284
    %v289 = vmul.f32 %v267, %v284
    %v290 = vmul.f32 %v268, %v284
    %v291 = vmul.f32 %v269, %v284
    %v292 = vmul.f32 %v270, %v284
    %v293 = vmul.f32 %v271, %v284
    %v294 = vmul.f32 %v272, %v284
    %v295 = vmul.f32 %v273, %v284
    %v296 = vmul.f32 %v274, %v284
    %v297 = vmul.f32 %v275, %v284
    %v298 = vmul.f32 %v276, %v284
    %v299 = vmul.f32 %v277, %v284
    %v300 = vmul.f32 %v278, %v284
    %v301 = vmul.f32 %v279, %v284
    %vm302 = vcmask 261120
    %v303 = vsel %vm302, %v286, 0.0
    %304 = vadd.xlane.f32.xlu0 %v303
    %v305 = vpop.xlane.xlu0 %304
    %v306 = vsel %vm302, %v287, 0.0
    %307 = vadd.xlane.f32.xlu0 %v306
    %v308 = vpop.xlane.xlu0 %307
    %v309 = vsel %vm302, %v288, 0.0
    %310 = vadd.xlane.f32.xlu0 %v309
    %v311 = vpop.xlane.xlu0 %310
    %v312 = vsel %vm302, %v289, 0.0
    %313 = vadd.xlane.f32.xlu0 %v312
    %v314 = vpop.xlane.xlu0 %313
    %v315 = vsel %vm302, %v290, 0.0
    %316 = vadd.xlane.f32.xlu0 %v315
    %v317 = vpop.xlane.xlu0 %316
    %v318 = vsel %vm302, %v291, 0.0
    %319 = vadd.xlane.f32.xlu0 %v318
    %v320 = vpop.xlane.xlu0 %319
    %v321 = vsel %vm302, %v292, 0.0
    %322 = vadd.xlane.f32.xlu0 %v321
    %v323 = vpop.xlane.xlu0 %322
    %v324 = vsel %vm302, %v293, 0.0
    %325 = vadd.xlane.f32.xlu0 %v324
    %v326 = vpop.xlane.xlu0 %325
    %v327 = vsel %vm302, %v294, 0.0
    %328 = vadd.xlane.f32.xlu0 %v327
    %v329 = vpop.xlane.xlu0 %328
    %v330 = vsel %vm302, %v295, 0.0
    %331 = vadd.xlane.f32.xlu0 %v330
    %v332 = vpop.xlane.xlu0 %331
    %v333 = vsel %vm302, %v296, 0.0
    %334 = vadd.xlane.f32.xlu0 %v333
    %v335 = vpop.xlane.xlu0 %334
    %v336 = vsel %vm302, %v297, 0.0
    %337 = vadd.xlane.f32.xlu0 %v336
    %v338 = vpop.xlane.xlu0 %337
    %v339 = vsel %vm302, %v298, 0.0
    %340 = vadd.xlane.f32.xlu0 %v339
    %v341 = vpop.xlane.xlu0 %340
    %v342 = vsel %vm302, %v299, 0.0
    %343 = vadd.xlane.f32.xlu0 %v342
    %v344 = vpop.xlane.xlu0 %343
    %v345 = vsel %vm302, %v300, 0.0
    %346 = vadd.xlane.f32.xlu0 %v345
    %v347 = vpop.xlane.xlu0 %346
    %v348 = vsel %vm302, %v301, 0.0
    %349 = vadd.xlane.f32.xlu0 %v348
    %v350 = vpop.xlane.xlu0 %349
    %v352 = vlaneseq
    %v353 = vshrl.u32 %v352, 7
    %v354 = vsub.s32 0, %v353
    %v355 = vrot.slane %v42, %v354
    %v357 = vmul.f32 %v48, %v355
    %v358 = vmul.f32 %v49, %v355
    %v359 = vmul.f32 %v50, %v355
    %v360 = vmul.f32 %v51, %v355
    %v361 = vmul.f32 %v52, %v355
    %v362 = vmul.f32 %v53, %v355
    %v363 = vmul.f32 %v54, %v355
    %v364 = vmul.f32 %v55, %v355
    %v365 = vmul.f32 %v56, %v355
    %v366 = vmul.f32 %v57, %v355
    %v367 = vmul.f32 %v58, %v355
    %v368 = vmul.f32 %v59, %v355
    %v369 = vmul.f32 %v60, %v355
    %v370 = vmul.f32 %v61, %v355
    %v371 = vmul.f32 %v62, %v355
    %v372 = vmul.f32 %v63, %v355
    %v373 = vsel %vm70, %v357, 0.0
    %374 = vadd.xlane.f32.xlu0 %v373
    %v375 = vpop.xlane.xlu0 %374
    %v376 = vsel %vm70, %v358, 0.0
    %377 = vadd.xlane.f32.xlu0 %v376
    %v378 = vpop.xlane.xlu0 %377
    %v379 = vsel %vm70, %v359, 0.0
    %380 = vadd.xlane.f32.xlu0 %v379
    %v381 = vpop.xlane.xlu0 %380
    %v382 = vsel %vm70, %v360, 0.0
    %383 = vadd.xlane.f32.xlu0 %v382
    %v384 = vpop.xlane.xlu0 %383
    %v385 = vsel %vm70, %v361, 0.0
    %386 = vadd.xlane.f32.xlu0 %v385
    %v387 = vpop.xlane.xlu0 %386
    %v388 = vsel %vm70, %v362, 0.0
    %389 = vadd.xlane.f32.xlu0 %v388
    %v390 = vpop.xlane.xlu0 %389
    %v391 = vsel %vm70, %v363, 0.0
    %392 = vadd.xlane.f32.xlu0 %v391
    %v393 = vpop.xlane.xlu0 %392
    %v394 = vsel %vm70, %v364, 0.0
    %395 = vadd.xlane.f32.xlu0 %v394
    %v396 = vpop.xlane.xlu0 %395
    %v397 = vsel %vm70, %v365, 0.0
    %398 = vadd.xlane.f32.xlu0 %v397
    %v399 = vpop.xlane.xlu0 %398
    %v400 = vsel %vm70, %v366, 0.0
    %401 = vadd.xlane.f32.xlu0 %v400
    %v402 = vpop.xlane.xlu0 %401
    %v403 = vsel %vm70, %v367, 0.0
    %404 = vadd.xlane.f32.xlu0 %v403
    %v405 = vpop.xlane.xlu0 %404
    %v406 = vsel %vm70, %v368, 0.0
    %407 = vadd.xlane.f32.xlu0 %v406
    %v408 = vpop.xlane.xlu0 %407
    %v409 = vsel %vm70, %v369, 0.0
    %410 = vadd.xlane.f32.xlu0 %v409
    %v411 = vpop.xlane.xlu0 %410
    %v412 = vsel %vm70, %v370, 0.0
    %413 = vadd.xlane.f32.xlu0 %v412
    %v414 = vpop.xlane.xlu0 %413
    %v415 = vsel %vm70, %v371, 0.0
    %416 = vadd.xlane.f32.xlu0 %v415
    %v417 = vpop.xlane.xlu0 %416
    %v418 = vsel %vm70, %v372, 0.0
    %419 = vadd.xlane.f32.xlu0 %v418
    %v420 = vpop.xlane.xlu0 %419
    %v421 = vadd.f32 %v305, %v375
    %v422 = vadd.f32 %v308, %v378
    %v423 = vadd.f32 %v311, %v381
    %v424 = vadd.f32 %v314, %v384
    %v425 = vadd.f32 %v317, %v387
    %v426 = vadd.f32 %v320, %v390
    %v427 = vadd.f32 %v323, %v393
    %v428 = vadd.f32 %v326, %v396
    %v429 = vadd.f32 %v329, %v399
    %v430 = vadd.f32 %v332, %v402
    %v431 = vadd.f32 %v335, %v405
    %v432 = vadd.f32 %v338, %v408
    %v433 = vadd.f32 %v341, %v411
    %v434 = vadd.f32 %v344, %v414
    %v435 = vadd.f32 %v347, %v417
    %v436 = vadd.f32 %v350, %v420
    %v437 = vstv %s43
    %v438 = vadd.f32 %v421, %v437
    %v439 = vadd.f32 %v422, %v437
    %v440 = vadd.f32 %v423, %v437
    %v441 = vadd.f32 %v424, %v437
    %v442 = vadd.f32 %v425, %v437
    %v443 = vadd.f32 %v426, %v437
    %v444 = vadd.f32 %v427, %v437
    %v445 = vadd.f32 %v428, %v437
    %v446 = vadd.f32 %v429, %v437
    %v447 = vadd.f32 %v430, %v437
    %v448 = vadd.f32 %v431, %v437
    %v449 = vadd.f32 %v432, %v437
    %v450 = vadd.f32 %v433, %v437
    %v451 = vadd.f32 %v434, %v437
    %v452 = vadd.f32 %v435, %v437
    %v453 = vadd.f32 %v436, %v437
    %v454 = vsub.f32 %v438, %v438
    %v455 = vsub.f32 %v439, %v439
    %v456 = vsub.f32 %v440, %v440
    %v457 = vsub.f32 %v441, %v441
    %v458 = vsub.f32 %v442, %v442
    %v459 = vsub.f32 %v443, %v443
    %v460 = vsub.f32 %v444, %v444
    %v461 = vsub.f32 %v445, %v445
    %v462 = vsub.f32 %v446, %v446
    %v463 = vsub.f32 %v447, %v447
    %v464 = vsub.f32 %v448, %v448
    %v465 = vsub.f32 %v449, %v449
    %v466 = vsub.f32 %v450, %v450
    %v467 = vsub.f32 %v451, %v451
    %v468 = vsub.f32 %v452, %v452
    %v469 = vsub.f32 %v453, %v453
    %v470 = vmul.f32 %v454, %v454
    %v471 = vmul.f32 %v455, %v455
    %v472 = vmul.f32 %v456, %v456
    %v473 = vmul.f32 %v457, %v457
    %v474 = vmul.f32 %v458, %v458
    %v475 = vmul.f32 %v459, %v459
    %v476 = vmul.f32 %v460, %v460
    %v477 = vmul.f32 %v461, %v461
    %v478 = vmul.f32 %v462, %v462
    %v479 = vmul.f32 %v463, %v463
    %v480 = vmul.f32 %v464, %v464
    %v481 = vmul.f32 %v465, %v465
    %v482 = vmul.f32 %v466, %v466
    %v483 = vmul.f32 %v467, %v467
    %v484 = vmul.f32 %v468, %v468
    %v485 = vmul.f32 %v469, %v469
    %v486 = vadd.f32 %v470, 1e-05
    %v487 = vadd.f32 %v471, 1e-05
    %v488 = vadd.f32 %v472, 1e-05
    %v489 = vadd.f32 %v473, 1e-05
    %v490 = vadd.f32 %v474, 1e-05
    %v491 = vadd.f32 %v475, 1e-05
    %v492 = vadd.f32 %v476, 1e-05
    %v493 = vadd.f32 %v477, 1e-05
    %v494 = vadd.f32 %v478, 1e-05
    %v495 = vadd.f32 %v479, 1e-05
    %v496 = vadd.f32 %v480, 1e-05
    %v497 = vadd.f32 %v481, 1e-05
    %v498 = vadd.f32 %v482, 1e-05
    %v499 = vadd.f32 %v483, 1e-05
    %v500 = vadd.f32 %v484, 1e-05
    %v501 = vadd.f32 %v485, 1e-05
    %v502 = vrsqrt.pop %v486
    %v503 = vrsqrt.pop %v487
    %v504 = vrsqrt.pop %v488
    %v505 = vrsqrt.pop %v489
    %v506 = vrsqrt.pop %v490
    %v507 = vrsqrt.pop %v491
    %v508 = vrsqrt.pop %v492
    %v509 = vrsqrt.pop %v493
    %v510 = vrsqrt.pop %v494
    %v511 = vrsqrt.pop %v495
    %v512 = vrsqrt.pop %v496
    %v513 = vrsqrt.pop %v497
    %v514 = vrsqrt.pop %v498
    %v515 = vrsqrt.pop %v499
    %v516 = vrsqrt.pop %v500
    %v517 = vrsqrt.pop %v501
    %v518 = vmul.f32 %v454, %v502
    %v519 = vmul.f32 %v455, %v503
    %v520 = vmul.f32 %v456, %v504
    %v521 = vmul.f32 %v457, %v505
    %v522 = vmul.f32 %v458, %v506
    %v523 = vmul.f32 %v459, %v507
    %v524 = vmul.f32 %v460, %v508
    %v525 = vmul.f32 %v461, %v509
    %v526 = vmul.f32 %v462, %v510
    %v527 = vmul.f32 %v463, %v511
    %v528 = vmul.f32 %v464, %v512
    %v529 = vmul.f32 %v465, %v513
    %v530 = vmul.f32 %v466, %v514
    %v531 = vmul.f32 %v467, %v515
    %v532 = vmul.f32 %v468, %v516
    %v533 = vmul.f32 %v469, %v517
    %v534 = vstv %s44
    %v535 = vmul.f32 %v518, %v534
    %v536 = vmul.f32 %v519, %v534
    %v537 = vmul.f32 %v520, %v534
    %v538 = vmul.f32 %v521, %v534
    %v539 = vmul.f32 %v522, %v534
    %v540 = vmul.f32 %v523, %v534
    %v541 = vmul.f32 %v524, %v534
    %v542 = vmul.f32 %v525, %v534
    %v543 = vmul.f32 %v526, %v534
    %v544 = vmul.f32 %v527, %v534
    %v545 = vmul.f32 %v528, %v534
    %v546 = vmul.f32 %v529, %v534
    %v547 = vmul.f32 %v530, %v534
    %v548 = vmul.f32 %v531, %v534
    %v549 = vmul.f32 %v532, %v534
    %v550 = vmul.f32 %v533, %v534
    %v551 = vstv %s45
    %v552 = vadd.f32 %v535, %v551
    %v553 = vadd.f32 %v536, %v551
    %v554 = vadd.f32 %v537, %v551
    %v555 = vadd.f32 %v538, %v551
    %v556 = vadd.f32 %v539, %v551
    %v557 = vadd.f32 %v540, %v551
    %v558 = vadd.f32 %v541, %v551
    %v559 = vadd.f32 %v542, %v551
    %v560 = vadd.f32 %v543, %v551
    %v561 = vadd.f32 %v544, %v551
    %v562 = vadd.f32 %v545, %v551
    %v563 = vadd.f32 %v546, %v551
    %v564 = vadd.f32 %v547, %v551
    %v565 = vadd.f32 %v548, %v551
    %v566 = vadd.f32 %v549, %v551
    %v567 = vadd.f32 %v550, %v551
    %v584 = vlaneseq
    %v585 = vand.u32 %v584, 127
    %v586 = vlaneseq
    %v587 = vshrl.u32 %v586, 7
    %v588 = vsub.s32 %v585, %v587
    %v589 = vrot.slane %v552, %v588
    %v590 = vadd.s32 %v585, 4294967288
    %v591 = vlaneseq
    %v592 = vshrl.u32 %v591, 7
    %v593 = vsub.s32 %v590, %v592
    %v594 = vrot.slane %v553, %v593
    %vm595 = vcmask 130112
    %v596 = vsel %vm595, %v594, %v589
    %v597 = vadd.s32 %v585, 4294967280
    %v598 = vlaneseq
    %v599 = vshrl.u32 %v598, 7
    %v600 = vsub.s32 %v597, %v599
    %v601 = vrot.slane %v554, %v600
    %vm602 = vcmask 195712
    %v603 = vsel %vm602, %v601, %v596
    %v604 = vadd.s32 %v585, 4294967272
    %v605 = vlaneseq
    %v606 = vshrl.u32 %v605, 7
    %v607 = vsub.s32 %v604, %v606
    %v608 = vrot.slane %v555, %v607
    %vm609 = vcmask 261312
    %v610 = vsel %vm609, %v608, %v603
    %v611 = vadd.s32 %v585, 4294967264
    %v612 = vlaneseq
    %v613 = vshrl.u32 %v612, 7
    %v614 = vsub.s32 %v611, %v613
    %v615 = vrot.slane %v556, %v614
    %vm616 = vcmask 326912
    %v617 = vsel %vm616, %v615, %v610
    %v618 = vadd.s32 %v585, 4294967256
    %v619 = vlaneseq
    %v620 = vshrl.u32 %v619, 7
    %v621 = vsub.s32 %v618, %v620
    %v622 = vrot.slane %v557, %v621
    %vm623 = vcmask 392512
    %v624 = vsel %vm623, %v622, %v617
    %v625 = vadd.s32 %v585, 4294967248
    %v626 = vlaneseq
    %v627 = vshrl.u32 %v626, 7
    %v628 = vsub.s32 %v625, %v627
    %v629 = vrot.slane %v558, %v628
    %vm630 = vcmask 458112
    %v631 = vsel %vm630, %v629, %v624
    %v632 = vadd.s32 %v585, 4294967240
    %v633 = vlaneseq
    %v634 = vshrl.u32 %v633, 7
    %v635 = vsub.s32 %v632, %v634
    %v636 = vrot.slane %v559, %v635
    %vm637 = vcmask 523712
    %v638 = vsel %vm637, %v636, %v631
    %v639 = vadd.s32 %v585, 4294967232
    %v640 = vlaneseq
    %v641 = vshrl.u32 %v640, 7
    %v642 = vsub.s32 %v639, %v641
    %v643 = vrot.slane %v560, %v642
    %vm644 = vcmask 589312
    %v645 = vsel %vm644, %v643, %v638
    %v646 = vadd.s32 %v585, 4294967224
    %v647 = vlaneseq
    %v648 = vshrl.u32 %v647, 7
    %v649 = vsub.s32 %v646, %v648
    %v650 = vrot.slane %v561, %v649
    %vm651 = vcmask 654912
    %v652 = vsel %vm651, %v650, %v645
    %v653 = vadd.s32 %v585, 4294967216
    %v654 = vlaneseq
    %v655 = vshrl.u32 %v654, 7
    %v656 = vsub.s32 %v653, %v655
    %v657 = vrot.slane %v562, %v656
    %vm658 = vcmask 720512
    %v659 = vsel %vm658, %v657, %v652
    %v660 = vadd.s32 %v585, 4294967208
    %v661 = vlaneseq
    %v662 = vshrl.u32 %v661, 7
    %v663 = vsub.s32 %v660, %v662
    %v664 = vrot.slane %v563, %v663
    %vm665 = vcmask 786112
    %v666 = vsel %vm665, %v664, %v659
    %v667 = vadd.s32 %v585, 4294967200
    %v668 = vlaneseq
    %v669 = vshrl.u32 %v668, 7
    %v670 = vsub.s32 %v667, %v669
    %v671 = vrot.slane %v564, %v670
    %vm672 = vcmask 851712
    %v673 = vsel %vm672, %v671, %v666
    %v674 = vadd.s32 %v585, 4294967192
    %v675 = vlaneseq
    %v676 = vshrl.u32 %v675, 7
    %v677 = vsub.s32 %v674, %v676
    %v678 = vrot.slane %v565, %v677
    %vm679 = vcmask 917312
    %v680 = vsel %vm679, %v678, %v673
    %v681 = vadd.s32 %v585, 4294967184
    %v682 = vlaneseq
    %v683 = vshrl.u32 %v682, 7
    %v684 = vsub.s32 %v681, %v683
    %v685 = vrot.slane %v566, %v684
    %vm686 = vcmask 982912
    %v687 = vsel %vm686, %v685, %v680
    %v688 = vadd.s32 %v585, 4294967176
    %v689 = vlaneseq
    %v690 = vshrl.u32 %v689, 7
    %v691 = vsub.s32 %v688, %v690
    %v692 = vrot.slane %v567, %v691
    %vm693 = vcmask 1048512
    %v694 = vsel %vm693, %v692, %v687
    %696 = vst [vmem:[#allocation5] sm:$0x1] %v694
    // Predicated region
    $region30: #{tpu_custom_call.1} parent=1 // pred_check
      _
    $region31: #{tpu_custom_call.1} parent=1 // pred_check_branch
      %698 = sbr.rel (0) target = $region33
    $region32: #{tpu_custom_call.1} parent=1 // pred_region
      %s700 = ssub.s32 16, 16
      %701 = vsyncadd [#allocation3], %s700
      %s703 = sshll.u32 [#allocation5], 4
      %s704 = int_to_ptr.vmem [resolvable:$true] %s703
      %706 = dma.vmem_to_hbm [thread:$0]  %s704, 16, %s6, [#allocation3]
    $region33: #{tpu_custom_call.1} parent=1 // pred_fallthru
      _
    // Predicated region
    $region34: #{tpu_custom_call.1} parent=1 // pred_check
      _
    $region35: #{tpu_custom_call.1} parent=1 // pred_check_branch
      %708 = sbr.rel (0) target = $region37
    $region36: #{tpu_custom_call.1} parent=1 // pred_region
      %709 = dma.done [#allocation3], 16
    $region37: #{tpu_custom_call.1} parent=1 // pred_fallthru
      _
    %710 = vsyncpa [#allocation3], 1
    %711 = vsyncpa [#allocation4], 1

</llo_original>
